<compile_context>
chip_gen: v7x
topology: tpu7x:2x2x1
jax: 0.10.0
libtpu: 0.0.40
codegen_flags: <defaults>
</compile_context>

<pallas_src>
import functools
import math

import jax
import jax.numpy as jnp
from jax.experimental import pallas as pl
from jax.experimental.pallas import tpu as pltpu


def _round_up(n, m):
    return ((n + m - 1) // m) * m


def gated_mlp_kernel(x_ref, wig_ref, big_ref, wo_ref, bo_ref, o_ref, *, hid):
    """One row-tile of the fused gated MLP.

    x_ref  : (tm, in_p)        compute dtype (bf16 or f32)
    wig_ref: (in_p, 2*hid)     fused [W_in | W_gate], compute dtype
    big_ref: (1, 2*hid)        fused [b_in | b_gate], f32
    wo_ref : (hid, out_p)      compute dtype
    bo_ref : (1, out_p)        f32
    o_ref  : (tm, out_p)
    """
    x = x_ref[...]

    # One wide MXU push for both the input and gate projections (f32 accumulate).
    hg = jnp.dot(x, wig_ref[...], preferred_element_type=jnp.float32)
    hg = hg + big_ref[...]                       # f32 bias add, broadcast over rows

    h = hg[:, :hid]
    gate = jax.nn.sigmoid(hg[:, hid:])           # EUP transcendental, f32
    gated = h * gate
    # TODO(synk): nn.Dropout(0.1) is identity in eval mode; training-mode dropout
    # would need pltpu.prng_seed / pltpu.prng_random_bits with a per-tile seed.

    out = jnp.dot(gated.astype(wo_ref.dtype), wo_ref[...],
                  preferred_element_type=jnp.float32)
    out = out + bo_ref[...]
    o_ref[...] = out.astype(o_ref.dtype)


def gated_mlp(x, params, *, tm=256, compute_dtype=jnp.bfloat16):
    """x: (batch, seq, in_dim) -> (batch, seq, out_dim).

    params = (wi, bi, wg, bg, wo, bo), weights pre-transposed to
    (fan_in, fan_out) — i.e. the transpose of the PyTorch nn.Linear weights.
    """
    wi, bi, wg, bg, wo, bo = params
    batch, seq, in_dim = x.shape
    hid = wi.shape[1]
    out_dim = wo.shape[1]

    # ---- lane-dense padding of feature dims to multiples of 128 ------------
    in_p = _round_up(in_dim, 128)
    hid_p = _round_up(hid, 128)
    out_p = _round_up(out_dim, 128)

    def pad2(a, r, c):
        return jnp.pad(a, ((0, r - a.shape[0]), (0, c - a.shape[1])))

    wi_p = pad2(wi, in_p, hid_p)
    wg_p = pad2(wg, in_p, hid_p)
    wo_p = pad2(wo, hid_p, out_p)

    # Fused first-stage weight/bias: [W_in | W_gate], [b_in | b_gate].
    wig = jnp.concatenate([wi_p, wg_p], axis=1).astype(compute_dtype)
    big = jnp.concatenate(
        [jnp.pad(bi, (0, hid_p - hid)), jnp.pad(bg, (0, hid_p - hid))]
    ).reshape(1, 2 * hid_p).astype(jnp.float32)
    wo_c = wo_p.astype(compute_dtype)
    bo_c = jnp.pad(bo, (0, out_p - out_dim)).reshape(1, out_p).astype(jnp.float32)

    # ---- row tiling: pad batch*seq up to a multiple of the row tile ---------
    M = batch * seq
    tm_eff = min(tm, _round_up(M, 16))           # don't over-tile tiny inputs
    M_pad = _round_up(M, tm_eff)
    x2d = x.reshape(M, in_dim).astype(compute_dtype)
    x2d = jnp.pad(x2d, ((0, M_pad - M), (0, in_p - in_dim)))

    grid = (M_pad // tm_eff,)

    # Advisory cost estimate for XLA scheduling around the custom call.
    itemsize = jnp.dtype(compute_dtype).itemsize
    flops = 2 * M_pad * (in_p * 2 * hid_p + hid_p * out_p)
    bytes_accessed = (
        M_pad * in_p * itemsize
        + (in_p * 2 * hid_p + hid_p * out_p) * itemsize
        + (2 * hid_p + out_p) * 4
        + M_pad * out_p * jnp.dtype(x.dtype).itemsize
    )

    out2d = pl.pallas_call(
        functools.partial(gated_mlp_kernel, hid=hid_p),
        out_shape=jax.ShapeDtypeStruct((M_pad, out_p), x.dtype),
        grid_spec=pltpu.PrefetchScalarGridSpec(
            num_scalar_prefetch=0,
            grid=grid,
            in_specs=[
                pl.BlockSpec((tm_eff, in_p), lambda i: (i, 0)),      # x rows
                # Constant index_maps: fetched once, VMEM-resident across grid.
                pl.BlockSpec((in_p, 2 * hid_p), lambda i: (0, 0)),   # [Wi|Wg]
                pl.BlockSpec((1, 2 * hid_p), lambda i: (0, 0)),      # [bi|bg]
                pl.BlockSpec((hid_p, out_p), lambda i: (0, 0)),      # Wo
                pl.BlockSpec((1, out_p), lambda i: (0, 0)),          # bo
            ],
            out_specs=pl.BlockSpec((tm_eff, out_p), lambda i: (i, 0)),
        ),
        compiler_params=pltpu.CompilerParams(
            dimension_semantics=("parallel",),   # row tiles shard across TCs
            vmem_limit_bytes=48 * 1024 * 1024,
        ),
        cost_estimate=pl.CostEstimate(
            flops=flops,
            transcendentals=M_pad * hid_p,
            bytes_accessed=bytes_accessed,
        ),
    )(x2d, wig, big, wo_c, bo_c)

    return out2d[:M, :out_dim].reshape(batch, seq, out_dim)


def init_params(key, in_dim, hid_dim, out_dim, dtype=jnp.float32):
    """Deterministic init mimicking nn.Linear's kaiming-uniform defaults.

    Weights are returned pre-transposed: (fan_in, fan_out)."""
    def linear_init(k, fan_in, fan_out):
        kw, kb = jax.random.split(k)
        limit = 1.0 / math.sqrt(fan_in)
        w = jax.random.uniform(kw, (fan_in, fan_out), dtype, -limit, limit)
        b = jax.random.uniform(kb, (fan_out,), dtype, -limit, limit)
        return w, b

    k1, k2, k3 = jax.random.split(key, 3)
    wi, bi = linear_init(k1, in_dim, hid_dim)
    wg, bg = linear_init(k2, in_dim, hid_dim)
    wo, bo = linear_init(k3, hid_dim, out_dim)
    return wi, bi, wg, bg, wo, bo


if __name__ == "__main__":
    key = jax.random.PRNGKey(0)
    k_x, k_p = jax.random.split(key)

    batch, seq = 2, 8
    in_dim, hid_dim, out_dim = 32, 64, 32

    x = jax.random.normal(k_x, (batch, seq, in_dim), jnp.float32)
    params = init_params(k_p, in_dim, hid_dim, out_dim)

    # Pure-JAX reference (eval-mode dropout == identity).
    wi, bi, wg, bg, wo, bo = params
    h = x @ wi + bi
    g = jax.nn.sigmoid(x @ wg + bg)
    ref = (h * g) @ wo + bo

    # Exact-precision path (f32 operands).
    out_f32 = jax.block_until_ready(gated_mlp(x, params, compute_dtype=jnp.float32))
    assert out_f32.shape == (batch, seq, out_dim)
    assert jnp.allclose(out_f32, ref, atol=1e-5, rtol=1e-5)

    # Fast path: bf16 operands, f32 accumulation (looser tolerance).
    out_bf16 = jax.block_until_ready(gated_mlp(x, params, compute_dtype=jnp.bfloat16))
    assert out_bf16.shape == (batch, seq, out_dim)
    assert jnp.allclose(out_bf16, ref, atol=3e-2, rtol=3e-2)

    print("KERNEL_OK")
</pallas_src>

<mosaic_0001>
module attributes {stable_mosaic.version = 11 : i64} {
  func.func @gated_mlp_kernel(%arg0: i32, %arg1: memref<16x128xf32, #tpu.memory_space<vmem>>, %arg2: memref<128x256xf32, #tpu.memory_space<vmem>>, %arg3: memref<1x256xf32, #tpu.memory_space<vmem>>, %arg4: memref<128x128xf32, #tpu.memory_space<vmem>>, %arg5: memref<1x128xf32, #tpu.memory_space<vmem>>, %arg6: memref<16x128xf32, #tpu.memory_space<vmem>>) attributes {dimension_semantics = [#tpu.dimension_semantics<parallel>], iteration_bounds = array<i64: 1>, scalar_prefetch = 0 : i64, scratch_operands = 0 : i64, tpu.core_type = #tpu.core_type<tc>, window_params = [{transform_indices = @transform_0, window_bounds = array<i64: 16, 128>}, {pipeline_mode = #tpu.pipeline_mode<synchronous>, transform_indices = @transform_1, window_bounds = array<i64: 128, 256>}, {pipeline_mode = #tpu.pipeline_mode<synchronous>, transform_indices = @transform_2, window_bounds = array<i64: 1, 256>}, {pipeline_mode = #tpu.pipeline_mode<synchronous>, transform_indices = @transform_3, window_bounds = array<i64: 128, 128>}, {pipeline_mode = #tpu.pipeline_mode<synchronous>, transform_indices = @transform_4, window_bounds = array<i64: 1, 128>}, {transform_indices = @transform_5, window_bounds = array<i64: 16, 128>}]} {
    %c0 = arith.constant 0 : index
    %c0_0 = arith.constant 0 : index
    %0 = vector.load %arg1[%c0, %c0_0] : memref<16x128xf32, #tpu.memory_space<vmem>>, vector<16x128xf32>
    %c0_1 = arith.constant 0 : index
    %c0_2 = arith.constant 0 : index
    %1 = vector.load %arg2[%c0_1, %c0_2] : memref<128x256xf32, #tpu.memory_space<vmem>>, vector<128x256xf32>
    %cst = arith.constant dense<0.000000e+00> : vector<16x256xf32>
    %2 = tpu.matmul %0, %1, %cst {dimension_numbers = #tpu.dot_dimension_numbers<[1], [0], [0], [1], [0, 0, 1, 1], [], []>} : vector<16x128xf32>, vector<128x256xf32>, vector<16x256xf32> -> vector<16x256xf32>
    %c0_3 = arith.constant 0 : index
    %c0_4 = arith.constant 0 : index
    %3 = vector.load %arg3[%c0_3, %c0_4] : memref<1x256xf32, #tpu.memory_space<vmem>>, vector<1x256xf32>
    %4 = vector.broadcast %3 : vector<1x256xf32> to vector<16x256xf32>
    %5 = arith.addf %2, %4 : vector<16x256xf32>
    %6 = vector.extract_strided_slice %5 {offsets = [0, 0], sizes = [16, 128], strides = [1, 1]} : vector<16x256xf32> to vector<16x128xf32>
    %7 = vector.extract_strided_slice %5 {offsets = [0, 128], sizes = [16, 128], strides = [1, 1]} : vector<16x256xf32> to vector<16x128xf32>
    %8 = arith.negf %7 : vector<16x128xf32>
    %9 = math.exp %8 : vector<16x128xf32>
    %cst_5 = arith.constant 1.000000e+00 : f32
    %10 = vector.broadcast %cst_5 : f32 to vector<16x128xf32>
    %11 = arith.addf %10, %9 : vector<16x128xf32>
    %12 = arith.divf %10, %11 : vector<16x128xf32>
    %13 = arith.mulf %6, %12 : vector<16x128xf32>
    %c0_6 = arith.constant 0 : index
    %c0_7 = arith.constant 0 : index
    %14 = vector.load %arg4[%c0_6, %c0_7] : memref<128x128xf32, #tpu.memory_space<vmem>>, vector<128x128xf32>
    %cst_8 = arith.constant dense<0.000000e+00> : vector<16x128xf32>
    %15 = tpu.matmul %13, %14, %cst_8 {dimension_numbers = #tpu.dot_dimension_numbers<[1], [0], [0], [1], [0, 0, 1, 1], [], []>} : vector<16x128xf32>, vector<128x128xf32>, vector<16x128xf32> -> vector<16x128xf32>
    %c0_9 = arith.constant 0 : index
    %c0_10 = arith.constant 0 : index
    %16 = vector.load %arg5[%c0_9, %c0_10] : memref<1x128xf32, #tpu.memory_space<vmem>>, vector<1x128xf32>
    %17 = vector.broadcast %16 : vector<1x128xf32> to vector<16x128xf32>
    %18 = arith.addf %15, %17 : vector<16x128xf32>
    %c0_11 = arith.constant 0 : index
    %c0_12 = arith.constant 0 : index
    %19 = vector.load %arg6[%c0_11, %c0_12] : memref<16x128xf32, #tpu.memory_space<vmem>>, vector<16x128xf32>
    tpu.vector_store %arg6[%c0_11, %c0_12], %18 {strides = array<i32>} : memref<16x128xf32, #tpu.memory_space<vmem>>, vector<16x128xf32>,
    return
  }
  func.func @transform_0(%arg0: i32) -> (i32, i32) {
    %c0_i32 = arith.constant 0 : i32
    %c0_i32_0 = arith.constant 0 : i32
    return %arg0, %c0_i32 : i32, i32
  }
  func.func @transform_1(%arg0: i32) -> (i32, i32) {
    %c0_i32 = arith.constant 0 : i32
    %c0_i32_0 = arith.constant 0 : i32
    %c0_i32_1 = arith.constant 0 : i32
    return %c0_i32, %c0_i32_0 : i32, i32
  }
  func.func @transform_2(%arg0: i32) -> (i32, i32) {
    %c0_i32 = arith.constant 0 : i32
    %c0_i32_0 = arith.constant 0 : i32
    %c0_i32_1 = arith.constant 0 : i32
    return %c0_i32, %c0_i32_0 : i32, i32
  }
  func.func @transform_3(%arg0: i32) -> (i32, i32) {
    %c0_i32 = arith.constant 0 : i32
    %c0_i32_0 = arith.constant 0 : i32
    %c0_i32_1 = arith.constant 0 : i32
    return %c0_i32, %c0_i32_0 : i32, i32
  }
  func.func @transform_4(%arg0: i32) -> (i32, i32) {
    %c0_i32 = arith.constant 0 : i32
    %c0_i32_0 = arith.constant 0 : i32
    %c0_i32_1 = arith.constant 0 : i32
    return %c0_i32, %c0_i32_0 : i32, i32
  }
  func.func @transform_5(%arg0: i32) -> (i32, i32) {
    %c0_i32 = arith.constant 0 : i32
    %c0_i32_0 = arith.constant 0 : i32
    return %arg0, %c0_i32 : i32, i32
  }
}

</mosaic_0001>

<llo_original>
// kernel: tpu_custom_call.1
$region0: #{tpu_custom_call.1}
  #allocation0 [shape = 'u32[]', space=smem, size = 0x4, offset = 0x4, fixed_abs, tag = 'smem constant byte address 0x4 - core index']
  #allocation1 [shape = 'u32[144,128]{1,0:T(1,128)}', space=vmem, size = 0x12000, scoped, tag = 'internal scratch']
  %s0 = inlined_call_operand.hbm [shape: f32[16,128], index: 0, kind: input, shape index: {}]
  %s1 = inlined_call_operand.hbm [shape: f32[128,256], index: 1, kind: input, shape index: {}]
  %s2 = inlined_call_operand.vmem [shape: f32[1,256], index: 2, kind: input, shape index: {}]
  %s3 = inlined_call_operand.hbm [shape: f32[128,128], index: 3, kind: input, shape index: {}]
  %s4 = inlined_call_operand.vmem [shape: f32[1,128], index: 4, kind: input, shape index: {}]
  %s5 = inlined_call_operand.hbm [shape: f32[16,128], index: 5, kind: output, shape index: {}]
  %s6 = sld [smem:[#allocation0]]
  $region42: #{tpu_custom_call.1} parent=0
    _
  %s8 = ssub.s32 1, %s6
  %s9 = scalar_select 0, %s8, %s6
  $region1: #{tpu_custom_call.1} parent=0
    #allocation2 [shape = 'u8[8192]{0}', space=vmem, size = 0x2000, scoped, tag = 'input window, operand 0, single buffered']
    #allocation3 [shape = 's32[1]{0}', space=sflag, size = 0x4, scoped, tag = 'scoped memory for tpu_custom_call.1']
    #allocation4 [shape = 's32[1]{0}', space=sflag, size = 0x4, scoped, tag = 'scoped memory for tpu_custom_call.1']
    #allocation5 [shape = 'u8[131072]{0}', space=vmem, size = 0x20000, scoped, tag = 'input window, operand 1, single buffered']
    #allocation6 [shape = 's32[1]{0}', space=sflag, size = 0x4, scoped, tag = 'scoped memory for tpu_custom_call.1']
    #allocation7 [shape = 'u8[65536]{0}', space=vmem, size = 0x10000, scoped, tag = 'input window, operand 3, single buffered']
    #allocation8 [shape = 'u8[8192]{0}', space=vmem, size = 0x2000, scoped, tag = 'output window, operand 0, single buffered']
    %10 = vsyncpa [#allocation3], 0
    %11 = vsyncpa [#allocation6], 0
    %12 = vsyncpa [#allocation4], 0
    // Predicated region
    $region2: #{tpu_custom_call.1} parent=1 // pred_check
      _
    $region3: #{tpu_custom_call.1} parent=1 // pred_check_branch
      %14 = sbr.rel (0) target = $region5
    $region4: #{tpu_custom_call.1} parent=1 // pred_region
      %s16 = ssub.s32 256, 256
      %17 = vsyncadd [#allocation3], %s16
      %s18 = sshll.u32 [#allocation2], 4
      %s19 = int_to_ptr.vmem [resolvable:$true] %s18
      %24 = dma.hbm_to_vmem [thread:$0]  %s0, 256, %s19, [#allocation3], 128, 128, 8
    $region5: #{tpu_custom_call.1} parent=1 // pred_fallthru
      _
    // Predicated region
    $region6: #{tpu_custom_call.1} parent=1 // pred_check
      _
    $region7: #{tpu_custom_call.1} parent=1 // pred_check_branch
      %26 = sbr.rel (0) target = $region9
    $region8: #{tpu_custom_call.1} parent=1 // pred_region
      %s28 = ssub.s32 4096, 4096
      %29 = vsyncadd [#allocation6], %s28
      %s30 = sshll.u32 [#allocation5], 4
      %s31 = int_to_ptr.vmem [resolvable:$true] %s30
      %36 = dma.hbm_to_vmem [thread:$0]  %s1, 4096, %s31, [#allocation6], 256, 256, 16
    $region9: #{tpu_custom_call.1} parent=1 // pred_fallthru
      _
    // Predicated region
    $region10: #{tpu_custom_call.1} parent=1 // pred_check
      _
    $region11: #{tpu_custom_call.1} parent=1 // pred_check_branch
      %38 = sbr.rel (0) target = $region13
    $region12: #{tpu_custom_call.1} parent=1 // pred_region
      _
    $region13: #{tpu_custom_call.1} parent=1 // pred_fallthru
      _
    // Predicated region
    $region14: #{tpu_custom_call.1} parent=1 // pred_check
      _
    $region15: #{tpu_custom_call.1} parent=1 // pred_check_branch
      %40 = sbr.rel (0) target = $region17
    $region16: #{tpu_custom_call.1} parent=1 // pred_region
      %s42 = ssub.s32 2048, 2048
      %43 = vsyncadd [#allocation6], %s42
      %s44 = sshll.u32 [#allocation7], 4
      %s45 = int_to_ptr.vmem [resolvable:$true] %s44
      %50 = dma.hbm_to_vmem [thread:$0]  %s3, 2048, %s45, [#allocation6], 128, 128, 8
    $region17: #{tpu_custom_call.1} parent=1 // pred_fallthru
      _
    // Predicated region
    $region18: #{tpu_custom_call.1} parent=1 // pred_check
      _
    $region19: #{tpu_custom_call.1} parent=1 // pred_check_branch
      %52 = sbr.rel (0) target = $region21
    $region20: #{tpu_custom_call.1} parent=1 // pred_region
      _
    $region21: #{tpu_custom_call.1} parent=1 // pred_fallthru
      _
    // Predicated region
    $region22: #{tpu_custom_call.1} parent=1 // pred_check
      _
    $region23: #{tpu_custom_call.1} parent=1 // pred_check_branch
      %54 = sbr.rel (0) target = $region25
    $region24: #{tpu_custom_call.1} parent=1 // pred_region
      %55 = dma.done [#allocation3], 256
    $region25: #{tpu_custom_call.1} parent=1 // pred_fallthru
      _
    // Predicated region
    $region26: #{tpu_custom_call.1} parent=1 // pred_check
      _
    $region27: #{tpu_custom_call.1} parent=1 // pred_check_branch
      %57 = sbr.rel (0) target = $region29
    $region28: #{tpu_custom_call.1} parent=1 // pred_region
      %58 = dma.done [#allocation6], 4096
    $region29: #{tpu_custom_call.1} parent=1 // pred_fallthru
      _
    // Predicated region
    $region30: #{tpu_custom_call.1} parent=1 // pred_check
      _
    $region31: #{tpu_custom_call.1} parent=1 // pred_check_branch
      %60 = sbr.rel (0) target = $region33
    $region32: #{tpu_custom_call.1} parent=1 // pred_region
      %61 = dma.done [#allocation6], 2048
    $region33: #{tpu_custom_call.1} parent=1 // pred_fallthru
      _
    %v62 = vld [vmem:[#allocation2] sm:$0xff]
    %v63 = vld [vmem:[#allocation2 + $0x8] sm:$0xff]
    %v64 = vld [vmem:[#allocation5] sm:$0xff]
    %v65 = vld [vmem:[#allocation5 + $0x8] sm:$0xff]
    %v66 = vld [vmem:[#allocation5 + $0x10] sm:$0xff]
    %v67 = vld [vmem:[#allocation5 + $0x18] sm:$0xff]
    %v68 = vld [vmem:[#allocation5 + $0x20] sm:$0xff]
    %v69 = vld [vmem:[#allocation5 + $0x28] sm:$0xff]
    %v70 = vld [vmem:[#allocation5 + $0x30] sm:$0xff]
    %v71 = vld [vmem:[#allocation5 + $0x38] sm:$0xff]
    %v72 = vld [vmem:[#allocation5 + $0x40] sm:$0xff]
    %v73 = vld [vmem:[#allocation5 + $0x48] sm:$0xff]
    %v74 = vld [vmem:[#allocation5 + $0x50] sm:$0xff]
    %v75 = vld [vmem:[#allocation5 + $0x58] sm:$0xff]
    %v76 = vld [vmem:[#allocation5 + $0x60] sm:$0xff]
    %v77 = vld [vmem:[#allocation5 + $0x68] sm:$0xff]
    %v78 = vld [vmem:[#allocation5 + $0x70] sm:$0xff]
    %v79 = vld [vmem:[#allocation5 + $0x78] sm:$0xff]
    %v80 = vld [vmem:[#allocation5 + $0x80] sm:$0xff]
    %v81 = vld [vmem:[#allocation5 + $0x88] sm:$0xff]
    %v82 = vld [vmem:[#allocation5 + $0x90] sm:$0xff]
    %v83 = vld [vmem:[#allocation5 + $0x98] sm:$0xff]
    %v84 = vld [vmem:[#allocation5 + $0xa0] sm:$0xff]
    %v85 = vld [vmem:[#allocation5 + $0xa8] sm:$0xff]
    %v86 = vld [vmem:[#allocation5 + $0xb0] sm:$0xff]
    %v87 = vld [vmem:[#allocation5 + $0xb8] sm:$0xff]
    %v88 = vld [vmem:[#allocation5 + $0xc0] sm:$0xff]
    %v89 = vld [vmem:[#allocation5 + $0xc8] sm:$0xff]
    %v90 = vld [vmem:[#allocation5 + $0xd0] sm:$0xff]
    %v91 = vld [vmem:[#allocation5 + $0xd8] sm:$0xff]
    %v92 = vld [vmem:[#allocation5 + $0xe0] sm:$0xff]
    %v93 = vld [vmem:[#allocation5 + $0xe8] sm:$0xff]
    %v94 = vld [vmem:[#allocation5 + $0xf0] sm:$0xff]
    %v95 = vld [vmem:[#allocation5 + $0xf8] sm:$0xff]
    %v96 = vld [vmem:[%s2] sm:$0x3]
    %v98 = vlaneseq
    %v99 = vshrl.u32 %v98, 7
    %v100 = vsub.s32 0, %v99
    %v101 = vrot.slane %v96, %v100
    %v102 = vlaneseq
    %v103 = vshrl.u32 %v102, 7
    %v104 = vsub.s32 1, %v103
    %v105 = vrot.slane %v96, %v104
    %108 = vmatprep.subr.mxu0 %v65
    %109 = vmatpush1.msra.mxu0 %v64
    %110 = vmatprep.subr.mxu0 %v67
    %111 = vmatpush1.msra.mxu0 %v66
    %112 = vmatprep.subr.mxu0 %v69
    %113 = vmatpush1.msra.mxu0 %v68
    %114 = vmatprep.subr.mxu0 %v71
    %115 = vmatpush1.msra.mxu0 %v70
    %116 = vmatprep.subr.mxu0 %v73
    %117 = vmatpush1.msra.mxu0 %v72
    %118 = vmatprep.subr.mxu0 %v75
    %119 = vmatpush1.msra.mxu0 %v74
    %120 = vmatprep.subr.mxu0 %v77
    %121 = vmatpush1.msra.mxu0 %v76
    %122 = vmatprep.subr.mxu0 %v79
    %123 = vmatpush1.msra.mxu0 %v78
    %124 = vmatprep.subr.mxu0 %v81
    %125 = vmatpush1.msra.mxu0 %v80
    %126 = vmatprep.subr.mxu0 %v83
    %127 = vmatpush1.msra.mxu0 %v82
    %128 = vmatprep.subr.mxu0 %v85
    %129 = vmatpush1.msra.mxu0 %v84
    %130 = vmatprep.subr.mxu0 %v87
    %131 = vmatpush1.msra.mxu0 %v86
    %132 = vmatprep.subr.mxu0 %v89
    %133 = vmatpush1.msra.mxu0 %v88
    %134 = vmatprep.subr.mxu0 %v91
    %135 = vmatpush1.msra.mxu0 %v90
    %136 = vmatprep.subr.mxu0 %v93
    %137 = vmatpush1.msra.mxu0 %v92
    %138 = vmatprep.subr.mxu0 %v95
    %139 = vmatpush1.msra.mxu0 %v94
    %140 = vmatprep.subr.mxu0 0.0
    %141 = vmatpush1.msra.mxu0 0.0
    %142 = vmatprep.subr.mxu0 0.0
    %143 = vmatpush1.msra.mxu0 0.0
    %144 = vmatprep.subr.mxu0 0.0
    %145 = vmatpush1.msra.mxu0 0.0
    %146 = vmatprep.subr.mxu0 0.0
    %147 = vmatpush1.msra.mxu0 0.0
    %148 = vmatprep.subr.mxu0 0.0
    %149 = vmatpush1.msra.mxu0 0.0
    %150 = vmatprep.subr.mxu0 0.0
    %151 = vmatpush1.msra.mxu0 0.0
    %152 = vmatprep.subr.mxu0 0.0
    %153 = vmatpush1.msra.mxu0 0.0
    %154 = vmatprep.subr.mxu0 0.0
    %155 = vmatpush1.msra.mxu0 0.0
    %156 = vmatprep.subr.mxu0 0.0
    %157 = vmatpush1.msra.mxu0 0.0
    %158 = vmatprep.subr.mxu0 0.0
    %159 = vmatpush1.msra.mxu0 0.0
    %160 = vmatprep.subr.mxu0 0.0
    %161 = vmatpush1.msra.mxu0 0.0
    %162 = vmatprep.subr.mxu0 0.0
    %163 = vmatpush1.msra.mxu0 0.0
    %164 = vmatprep.subr.mxu0 0.0
    %165 = vmatpush1.msra.mxu0 0.0
    %166 = vmatprep.subr.mxu0 0.0
    %167 = vmatpush1.msra.mxu0 0.0
    %168 = vmatprep.subr.mxu0 0.0
    %169 = vmatpush1.msra.mxu0 0.0
    %170 = vmatprep.subr.mxu0 0.0
    %171 = vmatpush1.msra.mxu0 0.0
    %172 = vmatprep.mubr.f32.mxu0 0.0
    %173 = vmatmul.mubr.f32.gmra.mrb[0].mxu0 %v62
    %v174 = vpop.f32.mrb[0].mxu0
    %v175 = vadd.f32 %v101, %v174
    %v176 = vpop.f32.mrb[0].mxu0
    %v177 = vadd.f32 %v105, %v176
    %178 = vmatprep.mubr.f32.mxu0 0.0
    %179 = vmatmul.mubr.f32.gmra.mrb[0].mxu0 %v63
    %v180 = vpop.f32.mrb[0].mxu0
    %v181 = vadd.f32 %v101, %v180
    %v182 = vpop.f32.mrb[0].mxu0
    %v183 = vadd.f32 %v105, %v182
    %184 = vdwg.mxu0
    %v185 = vxor.u32 %v177, 2147483648
    %v186 = vxor.u32 %v183, 2147483648
    %v187 = vmul.f32 %v185, 1.442695
    %v188 = vpow.pop %v187
    %v189 = vmul.f32 %v186, 1.442695
    %v190 = vpow.pop %v189
    %v191 = vadd.f32 %v188, 1.0
    %v192 = vadd.f32 %v190, 1.0
    %v193 = vrcp.pop %v191
    %v194 = vmul.f32 1.0, %v193
    %v195 = vrcp.pop %v192
    %v196 = vmul.f32 1.0, %v195
    %v197 = vmul.f32 %v175, %v194
    %v198 = vmul.f32 %v181, %v196
    %v199 = vld [vmem:[#allocation7] sm:$0xff]
    %v200 = vld [vmem:[#allocation7 + $0x8] sm:$0xff]
    %v201 = vld [vmem:[#allocation7 + $0x10] sm:$0xff]
    %v202 = vld [vmem:[#allocation7 + $0x18] sm:$0xff]
    %v203 = vld [vmem:[#allocation7 + $0x20] sm:$0xff]
    %v204 = vld [vmem:[#allocation7 + $0x28] sm:$0xff]
    %v205 = vld [vmem:[#allocation7 + $0x30] sm:$0xff]
    %v206 = vld [vmem:[#allocation7 + $0x38] sm:$0xff]
    %v207 = vld [vmem:[#allocation7 + $0x40] sm:$0xff]
    %v208 = vld [vmem:[#allocation7 + $0x48] sm:$0xff]
    %v209 = vld [vmem:[#allocation7 + $0x50] sm:$0xff]
    %v210 = vld [vmem:[#allocation7 + $0x58] sm:$0xff]
    %v211 = vld [vmem:[#allocation7 + $0x60] sm:$0xff]
    %v212 = vld [vmem:[#allocation7 + $0x68] sm:$0xff]
    %v213 = vld [vmem:[#allocation7 + $0x70] sm:$0xff]
    %v214 = vld [vmem:[#allocation7 + $0x78] sm:$0xff]
    %v215 = vld [vmem:[%s4] sm:$0x1]
    %v217 = vlaneseq
    %v218 = vshrl.u32 %v217, 7
    %v219 = vsub.s32 0, %v218
    %v220 = vrot.slane %v215, %v219
    %222 = vmatprep.subr.mxu0 0.0
    %223 = vmatpush1.msra.mxu0 %v199
    %224 = vmatprep.subr.mxu0 0.0
    %225 = vmatpush1.msra.mxu0 %v200
    %226 = vmatprep.subr.mxu0 0.0
    %227 = vmatpush1.msra.mxu0 %v201
    %228 = vmatprep.subr.mxu0 0.0
    %229 = vmatpush1.msra.mxu0 %v202
    %230 = vmatprep.subr.mxu0 0.0
    %231 = vmatpush1.msra.mxu0 %v203
    %232 = vmatprep.subr.mxu0 0.0
    %233 = vmatpush1.msra.mxu0 %v204
    %234 = vmatprep.subr.mxu0 0.0
    %235 = vmatpush1.msra.mxu0 %v205
    %236 = vmatprep.subr.mxu0 0.0
    %237 = vmatpush1.msra.mxu0 %v206
    %238 = vmatprep.subr.mxu0 0.0
    %239 = vmatpush1.msra.mxu0 %v207
    %240 = vmatprep.subr.mxu0 0.0
    %241 = vmatpush1.msra.mxu0 %v208
    %242 = vmatprep.subr.mxu0 0.0
    %243 = vmatpush1.msra.mxu0 %v209
    %244 = vmatprep.subr.mxu0 0.0
    %245 = vmatpush1.msra.mxu0 %v210
    %246 = vmatprep.subr.mxu0 0.0
    %247 = vmatpush1.msra.mxu0 %v211
    %248 = vmatprep.subr.mxu0 0.0
    %249 = vmatpush1.msra.mxu0 %v212
    %250 = vmatprep.subr.mxu0 0.0
    %251 = vmatpush1.msra.mxu0 %v213
    %252 = vmatprep.subr.mxu0 0.0
    %253 = vmatpush1.msra.mxu0 %v214
    %254 = vmatprep.subr.mxu0 0.0
    %255 = vmatpush1.msra.mxu0 0.0
    %256 = vmatprep.subr.mxu0 0.0
    %257 = vmatpush1.msra.mxu0 0.0
    %258 = vmatprep.subr.mxu0 0.0
    %259 = vmatpush1.msra.mxu0 0.0
    %260 = vmatprep.subr.mxu0 0.0
    %261 = vmatpush1.msra.mxu0 0.0
    %262 = vmatprep.subr.mxu0 0.0
    %263 = vmatpush1.msra.mxu0 0.0
    %264 = vmatprep.subr.mxu0 0.0
    %265 = vmatpush1.msra.mxu0 0.0
    %266 = vmatprep.subr.mxu0 0.0
    %267 = vmatpush1.msra.mxu0 0.0
    %268 = vmatprep.subr.mxu0 0.0
    %269 = vmatpush1.msra.mxu0 0.0
    %270 = vmatprep.subr.mxu0 0.0
    %271 = vmatpush1.msra.mxu0 0.0
    %272 = vmatprep.subr.mxu0 0.0
    %273 = vmatpush1.msra.mxu0 0.0
    %274 = vmatprep.subr.mxu0 0.0
    %275 = vmatpush1.msra.mxu0 0.0
    %276 = vmatprep.subr.mxu0 0.0
    %277 = vmatpush1.msra.mxu0 0.0
    %278 = vmatprep.subr.mxu0 0.0
    %279 = vmatpush1.msra.mxu0 0.0
    %280 = vmatprep.subr.mxu0 0.0
    %281 = vmatpush1.msra.mxu0 0.0
    %282 = vmatprep.subr.mxu0 0.0
    %283 = vmatpush1.msra.mxu0 0.0
    %284 = vmatprep.subr.mxu0 0.0
    %285 = vmatpush1.msra.mxu0 0.0
    %286 = vmatprep.mubr.f32.mxu0 0.0
    %287 = vmatmul.mubr.f32.gmra.mrb[0].mxu0 %v197
    %v288 = vpop.f32.mrb[0].mxu0
    %v289 = vadd.f32 %v220, %v288
    %v290 = vpop.f32.mrb[0].mxu0
    %291 = vmatprep.mubr.f32.mxu0 0.0
    %292 = vmatmul.mubr.f32.gmra.mrb[0].mxu0 %v198
    %v293 = vpop.f32.mrb[0].mxu0
    %v294 = vadd.f32 %v220, %v293
    %v295 = vpop.f32.mrb[0].mxu0
    %296 = vdwg.mxu0
    %297 = vst [vmem:[#allocation8] sm:$0xff] %v289
    %298 = vst [vmem:[#allocation8 + $0x8] sm:$0xff] %v294
    // Predicated region
    $region34: #{tpu_custom_call.1} parent=1 // pred_check
      _
    $region35: #{tpu_custom_call.1} parent=1 // pred_check_branch
      %300 = sbr.rel (0) target = $region37
    $region36: #{tpu_custom_call.1} parent=1 // pred_region
      %s302 = ssub.s32 256, 256
      %303 = vsyncadd [#allocation4], %s302
      %s304 = sshll.u32 [#allocation8], 4
      %s305 = int_to_ptr.vmem [resolvable:$true] %s304
      %310 = dma.vmem_to_hbm [thread:$0]  %s305, 256, %s5, [#allocation4], 128, 128, 8
    $region37: #{tpu_custom_call.1} parent=1 // pred_fallthru
      _
    // Predicated region
    $region38: #{tpu_custom_call.1} parent=1 // pred_check
      _
    $region39: #{tpu_custom_call.1} parent=1 // pred_check_branch
      %312 = sbr.rel (0) target = $region41
    $region40: #{tpu_custom_call.1} parent=1 // pred_region
      %313 = dma.done [#allocation4], 256
    $region41: #{tpu_custom_call.1} parent=1 // pred_fallthru
      _
    %314 = vsyncpa [#allocation3], 1
    %315 = vsyncpa [#allocation6], 1
    %316 = vsyncpa [#allocation4], 1

</llo_original>
